<compile_context>
chip_gen: v7x
topology: tpu7x:2x2x1
jax: 0.10.0
libtpu: 0.0.40
codegen_flags: <defaults>
</compile_context>

<pallas_src>
import functools
import math

import jax
import jax.numpy as jnp
from jax.experimental import pallas as pl
from jax.experimental.pallas import tpu as pltpu

_SUBLANE = 8
_LANE = 128
_BUF_BYTES = 4 * 1024 * 1024        # target bytes for one pipeline buffer
_VMEM_LIMIT = 32 * 1024 * 1024      # >= v5e's 16 MiB default, <= v7x physical
_MIN_GRID_BLOCKS = 4                # keep both v7x TCs + pipeline busy


def _round_up(n, m):
    return (n + m - 1) // m * m


def _normalize_kernel(x_ref, o_ref, *, power, axis):
    """Normalize a tile along `axis`; math in f32, I/O in native dtype."""
    x = x_ref[...].astype(jnp.float32)
    if power == 2:
        # Fast path: sum of squares + rsqrt (EUP slot), one VPU multiply.
        inv = jax.lax.rsqrt(jnp.sum(x * x, axis=axis, keepdims=True))
    else:
        # Generic p-norm matching torch (x.pow(p), not |x|^p); s^(-1/p) keeps
        # the per-element work to a single multiply.
        s = jnp.sum(jnp.power(x, power), axis=axis, keepdims=True)
        inv = jnp.power(s, -1.0 / power)
    o_ref[...] = (x * inv).astype(o_ref.dtype)


def _choose_row_tile(rows, d, itemsize):
    """Row tile for the 2-D path: byte-budgeted, multiple of 8 sublanes."""
    tb = _BUF_BYTES // max(1, d * itemsize)
    tb = max(_SUBLANE, (tb // _SUBLANE) * _SUBLANE)
    # Keep >= _MIN_GRID_BLOCKS grid steps when rows allow it (v7x: 2 TCs).
    cap = _round_up(pl.cdiv(rows, _MIN_GRID_BLOCKS), _SUBLANE)
    tb = max(_SUBLANE, min(tb, cap))
    if tb >= rows:
        tb = rows  # full dim -> exempt from the sublane-divisibility rule
    # Note: for extremely wide rows (d*itemsize*4 buffers > VMEM) the
    # reduction dim simply cannot be tiled; compile fails cleanly against
    # vmem_limit_bytes rather than silently corrupting.
    return tb


def _choose_lane_tile(s, c, itemsize, n_outer):
    """Spatial (lane) tile for the N-D path: byte-budgeted, multiple of 128."""
    ts = _BUF_BYTES // max(1, c * itemsize)
    ts = max(_LANE, (ts // _LANE) * _LANE)
    if n_outer < _MIN_GRID_BLOCKS:
        want = pl.cdiv(_MIN_GRID_BLOCKS, n_outer)
        cap = _round_up(pl.cdiv(s, want), _LANE)
        ts = min(ts, max(_LANE, cap))
    if ts >= s:
        ts = s  # full dim -> exempt from the 128-lane divisibility rule
    return ts


def _normalize_2d(x, power):
    rows, d = x.shape
    itemsize = jnp.dtype(x.dtype).itemsize
    tb = _choose_row_tile(rows, d, itemsize)
    grid = (pl.cdiv(rows, tb),)
    spec = pl.BlockSpec((tb, d), lambda i: (i, 0))
    cost = pl.CostEstimate(
        flops=int(3 * rows * d),
        transcendentals=int(rows),
        bytes_accessed=int(2 * rows * d * itemsize),
    )
    return pl.pallas_call(
        functools.partial(_normalize_kernel, power=power, axis=-1),
        out_shape=jax.ShapeDtypeStruct((rows, d), x.dtype),
        grid=grid,
        in_specs=[spec],
        out_specs=spec,
        compiler_params=pltpu.CompilerParams(
            dimension_semantics=("parallel",),
            vmem_limit_bytes=_VMEM_LIMIT,
        ),
        cost_estimate=cost,
    )(x)


def _normalize_nd(x, power):
    n, c = x.shape[0], x.shape[1]
    s = math.prod(x.shape[2:])
    itemsize = jnp.dtype(x.dtype).itemsize
    # Merging trailing contiguous dims is layout-preserving (no HBM transpose).
    x3 = x.reshape(n, c, s)
    ts = _choose_lane_tile(s, c, itemsize, n)
    grid = (n, pl.cdiv(s, ts))
    spec = pl.BlockSpec((1, c, ts), lambda i, j: (i, 0, j))
    cost = pl.CostEstimate(
        flops=int(3 * n * c * s),
        transcendentals=int(n * s),
        bytes_accessed=int(2 * n * c * s * itemsize),
    )
    out = pl.pallas_call(
        functools.partial(_normalize_kernel, power=power, axis=1),
        out_shape=jax.ShapeDtypeStruct((n, c, s), x.dtype),
        grid=grid,
        in_specs=[spec],
        out_specs=spec,
        compiler_params=pltpu.CompilerParams(
            dimension_semantics=("parallel", "parallel"),
            vmem_limit_bytes=_VMEM_LIMIT,
        ),
        cost_estimate=cost,
    )(x3)
    return out.reshape(x.shape)


def normalize(x, power=2):
    """Pallas implementation of Normalize(power).forward(x): p-norm over dim 1."""
    if x.ndim < 2:
        raise ValueError("Normalize expects at least 2 dims (reduction over dim 1)")
    if x.ndim == 2:
        return _normalize_2d(x, power)
    return _normalize_nd(x, power)


def reference_normalize(x, power=2):
    """Pure-JAX reference mirroring the PyTorch forward."""
    xp = x * x if power == 2 else jnp.power(x, power)
    norm = jnp.power(jnp.sum(xp, axis=1, keepdims=True), 1.0 / power)
    return x / norm


if __name__ == "__main__":
    key = jax.random.PRNGKey(0)
    k1, k2, k3, k4 = jax.random.split(key, 4)

    # Typical BarlowTwins usage: L2-normalize a small [B, D] embedding batch.
    x2d = jax.random.normal(k1, (8, 32), jnp.float32)
    out2d = jax.block_until_ready(normalize(x2d))
    ref2d = reference_normalize(x2d)
    assert out2d.shape == x2d.shape and out2d.dtype == x2d.dtype
    assert jnp.allclose(out2d, ref2d, atol=1e-5, rtol=1e-5), "2-D mismatch"

    # Ragged row count / non-128 feature dim (exercises partial final block).
    x2r = jax.random.normal(k2, (50, 96), jnp.float32)
    out2r = jax.block_until_ready(normalize(x2r))
    ref2r = reference_normalize(x2r)
    assert jnp.allclose(out2r, ref2r, atol=1e-5, rtol=1e-5), "ragged 2-D mismatch"

    # Generic dim=1 semantics on an NCHW feature map (channel-wise L2 norm).
    x4d = jax.random.normal(k3, (2, 4, 16, 16), jnp.float32)
    out4d = jax.block_until_ready(normalize(x4d))
    ref4d = reference_normalize(x4d)
    assert out4d.shape == x4d.shape and out4d.dtype == x4d.dtype
    assert jnp.allclose(out4d, ref4d, atol=1e-5, rtol=1e-5), "4-D mismatch"

    # Generic power (p=3) path; positive inputs to avoid NaN in both ref/kernel.
    x3p = jnp.abs(jax.random.normal(k4, (2, 4, 10, 13), jnp.float32)) + 0.1
    out3p = jax.block_until_ready(normalize(x3p, power=3))
    ref3p = reference_normalize(x3p, power=3)
    assert jnp.allclose(out3p, ref3p, atol=1e-5, rtol=1e-5), "p=3 mismatch"

    print("KERNEL_OK")
</pallas_src>

<mosaic_0001>
module attributes {stable_mosaic.version = 11 : i64} {
  func.func @_normalize_kernel(%arg0: i32, %arg1: memref<8x32xf32, #tpu.memory_space<vmem>>, %arg2: memref<8x32xf32, #tpu.memory_space<vmem>>) attributes {dimension_semantics = [#tpu.dimension_semantics<parallel>], iteration_bounds = array<i64: 1>, scalar_prefetch = 0 : i64, scratch_operands = 0 : i64, tpu.core_type = #tpu.core_type<tc>, window_params = [{transform_indices = @transform_0, window_bounds = array<i64: 8, 32>}, {transform_indices = @transform_1, window_bounds = array<i64: 8, 32>}]} {
    %c0 = arith.constant 0 : index
    %c0_0 = arith.constant 0 : index
    %0 = vector.load %arg1[%c0, %c0_0] : memref<8x32xf32, #tpu.memory_space<vmem>>, vector<8x32xf32>
    %1 = arith.mulf %0, %0 : vector<8x32xf32>
    %cst = arith.constant dense<0.000000e+00> : vector<8xf32>
    %2 = vector.multi_reduction <add>, %1, %cst [1] : vector<8x32xf32> to vector<8xf32>
    %3 = vector.shape_cast %2 : vector<8xf32> to vector<8x1xf32>
    %4 = math.rsqrt %3 : vector<8x1xf32>
    %5 = vector.broadcast %4 : vector<8x1xf32> to vector<8x32xf32>
    %6 = arith.mulf %0, %5 : vector<8x32xf32>
    %c0_1 = arith.constant 0 : index
    %c0_2 = arith.constant 0 : index
    %7 = vector.load %arg2[%c0_1, %c0_2] : memref<8x32xf32, #tpu.memory_space<vmem>>, vector<8x32xf32>
    tpu.vector_store %arg2[%c0_1, %c0_2], %6 {strides = array<i32>} : memref<8x32xf32, #tpu.memory_space<vmem>>, vector<8x32xf32>,
    return
  }
  func.func @transform_0(%arg0: i32) -> (i32, i32) {
    %c0_i32 = arith.constant 0 : i32
    %c0_i32_0 = arith.constant 0 : i32
    return %arg0, %c0_i32 : i32, i32
  }
  func.func @transform_1(%arg0: i32) -> (i32, i32) {
    %c0_i32 = arith.constant 0 : i32
    %c0_i32_0 = arith.constant 0 : i32
    return %arg0, %c0_i32 : i32, i32
  }
}

</mosaic_0001>

<llo_original>
// kernel: tpu_custom_call.1
$region0: #{tpu_custom_call.1}
  #allocation0 [shape = 'u32[]', space=smem, size = 0x4, offset = 0x4, fixed_abs, tag = 'smem constant byte address 0x4 - core index']
  #allocation1 [shape = 'u32[144,128]{1,0:T(1,128)}', space=vmem, size = 0x12000, scoped, tag = 'internal scratch']
  %s0 = inlined_call_operand.hbm [shape: f32[8,32], index: 0, kind: input, shape index: {}]
  %s1 = inlined_call_operand.hbm [shape: f32[8,32], index: 1, kind: output, shape index: {}]
  %s2 = sld [smem:[#allocation0]]
  $region18: #{tpu_custom_call.1} parent=0
    _
  %s4 = ssub.s32 1, %s2
  %s5 = scalar_select 0, %s4, %s2
  $region1: #{tpu_custom_call.1} parent=0
    #allocation2 [shape = 'u8[4096]{0}', space=vmem, size = 0x1000, scoped, tag = 'input window, operand 0, single buffered']
    #allocation3 [shape = 's32[1]{0}', space=sflag, size = 0x4, scoped, tag = 'scoped memory for tpu_custom_call.1']
    #allocation4 [shape = 's32[1]{0}', space=sflag, size = 0x4, scoped, tag = 'scoped memory for tpu_custom_call.1']
    #allocation5 [shape = 'u8[4096]{0}', space=vmem, size = 0x1000, scoped, tag = 'output window, operand 0, single buffered']
    %6 = vsyncpa [#allocation3], 0
    %7 = vsyncpa [#allocation4], 0
    // Predicated region
    $region2: #{tpu_custom_call.1} parent=1 // pred_check
      _
    $region3: #{tpu_custom_call.1} parent=1 // pred_check_branch
      %9 = sbr.rel (0) target = $region5
    $region4: #{tpu_custom_call.1} parent=1 // pred_region
      %s11 = ssub.s32 128, 128
      %12 = vsyncadd [#allocation3], %s11
      %s14 = sshll.u32 [#allocation2], 4
      %s15 = int_to_ptr.vmem [resolvable:$true] %s14
      %17 = dma.hbm_to_vmem [thread:$0]  %s0, 128, %s15, [#allocation3]
    $region5: #{tpu_custom_call.1} parent=1 // pred_fallthru
      _
    // Predicated region
    $region6: #{tpu_custom_call.1} parent=1 // pred_check
      _
    $region7: #{tpu_custom_call.1} parent=1 // pred_check_branch
      %19 = sbr.rel (0) target = $region9
    $region8: #{tpu_custom_call.1} parent=1 // pred_region
      %20 = dma.done [#allocation3], 128
    $region9: #{tpu_custom_call.1} parent=1 // pred_fallthru
      _
    %v21 = vld [vmem:[#allocation2] sm:$0xff]
    %v22 = vmul.f32 %v21, %v21
    %vm23 = vcmask 261120
    %v24 = vsel %vm23, %v22, 0.0
    %25 = vadd.xlane.f32.xlu0 %v24
    %v26 = vpop.xlane.xlu0 %25
    %v27 = vrsqrt.pop %v26
    %v28 = vmul.f32 %v21, %v27
    %29 = vst.msk [vmem:[#allocation5] sm:$0xff] %vm23, %v28
    // Predicated region
    $region10: #{tpu_custom_call.1} parent=1 // pred_check
      _
    $region11: #{tpu_custom_call.1} parent=1 // pred_check_branch
      %31 = sbr.rel (0) target = $region13
    $region12: #{tpu_custom_call.1} parent=1 // pred_region
      %s33 = ssub.s32 128, 128
      %34 = vsyncadd [#allocation4], %s33
      %s36 = sshll.u32 [#allocation5], 4
      %s37 = int_to_ptr.vmem [resolvable:$true] %s36
      %39 = dma.vmem_to_hbm [thread:$0]  %s37, 128, %s1, [#allocation4]
    $region13: #{tpu_custom_call.1} parent=1 // pred_fallthru
      _
    // Predicated region
    $region14: #{tpu_custom_call.1} parent=1 // pred_check
      _
    $region15: #{tpu_custom_call.1} parent=1 // pred_check_branch
      %41 = sbr.rel (0) target = $region17
    $region16: #{tpu_custom_call.1} parent=1 // pred_region
      %42 = dma.done [#allocation4], 128
    $region17: #{tpu_custom_call.1} parent=1 // pred_fallthru
      _
    %43 = vsyncpa [#allocation3], 1
    %44 = vsyncpa [#allocation4], 1

</llo_original>
